<compile_context>
chip_gen: v6e
topology: v6e:2x2x1
jax: 0.10.0
libtpu: 0.0.40
codegen_flags: <defaults>
</compile_context>

<pallas_src>
import functools

import jax
import jax.numpy as jnp
from jax import lax
from jax.experimental import pallas as pl
from jax.experimental.pallas import tpu as pltpu


# ---------------------------------------------------------------------------
# helpers
# ---------------------------------------------------------------------------

def _round_up(v, m):
    return -(-v // m) * m


def _padded_bytes(shape, itemsize):
    """Approximate VMEM footprint after sublane/lane tile padding."""
    shape = tuple(shape)
    if len(shape) == 1:
        shape = (1,) + shape
    lead = 1
    for d in shape[:-2]:
        lead *= d
    sublane = 8 * max(1, 4 // itemsize)          # bf16 packs 16 rows per vreg
    return lead * _round_up(shape[-2], sublane) * _round_up(shape[-1], 128) * itemsize


def _vmem_capacity_bytes():
    try:
        return int(pltpu.get_tpu_info().vmem_capacity_bytes)
    except Exception:
        return 64 << 20                          # conservative default (v7x per-TC)


def _pick_lane_tile(n, rows, itemsize, budget_bytes, n_buffers=2, max_tile=32768):
    """Largest multiple-of-128 lane tile dividing n whose n_buffers-deep
    (rows, tile) VMEM footprint fits the budget."""
    assert n % 128 == 0
    best = 128
    t = 128
    top = min(n, max_tile)
    while t <= top:
        if n % t == 0 and n_buffers * _padded_bytes((rows, t), itemsize) <= budget_bytes:
            best = t
        t += 128
    return best


def _pick_sublane_tile(rows, cap=512):
    """Largest multiple-of-8 tile dividing rows; full extent when small or not
    8-aligned (a full-extent leading block dim is always legal)."""
    if rows <= cap or rows % 8 != 0:
        return rows
    best = 8
    for t in range(8, cap + 1, 8):
        if rows % t == 0:
            best = t
    return best


# ---------------------------------------------------------------------------
# kernels
# ---------------------------------------------------------------------------

def _srm_stats_kernel(x_ref, w_mean_ref, w_std_ref, w_gram_ref, z_ref,
                      sum_acc, sumsq_acc, gram_acc,
                      *, n_spatial, total_numel, use_bf16_mxu):
    t = pl.program_id(1)
    nt = pl.num_programs(1)

    @pl.when(t == 0)
    def _init():
        sum_acc[...] = jnp.zeros_like(sum_acc)
        sumsq_acc[...] = jnp.zeros_like(sumsq_acc)
        gram_acc[...] = jnp.zeros_like(gram_acc)

    x_raw = x_ref[0]                                     # (C, tn) native dtype
    x = x_raw.astype(jnp.float32)

    # Streaming spatial reductions: one pass over x, no x-sized temporaries.
    # The extra x*x multiply + lane reduce hides under the HBM DMA (mem-bound)
    # and keeps the variance path in f32 even when the Gram uses bf16 inputs.
    sum_acc[...] += jnp.sum(x, axis=-1, keepdims=True)        # (C, 1)
    sumsq_acc[...] += jnp.sum(x * x, axis=-1, keepdims=True)  # (C, 1)

    # Raw Gram accumulation (A @ A^T, both operands contract on the lane axis),
    # MXU with f32 accumulation.  bf16 inputs only for large C / sub-f32 x.
    xg = x_raw.astype(jnp.bfloat16) if use_bf16_mxu else x
    gram_acc[...] += lax.dot_general(
        xg, xg,
        dimension_numbers=(((1,), (1,)), ((), ())),
        preferred_element_type=jnp.float32)                   # (C, C)

    @pl.when(t == nt - 1)
    def _finalize():
        inv_n = 1.0 / float(n_spatial)
        inv_nm1 = 1.0 / float(n_spatial - 1) if n_spatial > 1 else 0.0
        inv_total = 1.0 / float(total_numel)

        s = sum_acc[...]                                      # (C, 1)
        mean = s * inv_n
        # torch.std is unbiased (ddof=1).  Single-pass E[x^2]-E[x]^2 in f32;
        # clamp tiny negative cancellation (acceptable for a gating signal).
        var = jnp.maximum(sumsq_acc[...] - s * mean, 0.0) * inv_nm1
        std = jnp.sqrt(var)

        gram = gram_acc[...] * inv_total                      # (C, C), /(B*C*H*W)

        # Depthwise Conv1d over u = [mean, std, gram_row]: the kernel span is
        # C+2 == len(u), so it reduces to a per-channel dot product with the
        # weight pre-split in the wrapper (no concat, no unaligned lane slice).
        z_ref[0] = (mean * w_mean_ref[...]
                    + std * w_std_ref[...]
                    + jnp.sum(gram * w_gram_ref[...], axis=-1, keepdims=True))


def _srm_apply_kernel(g_ref, x_ref, o_ref):
    # Elementwise gate over sublane/lane-dense (rows, lanes) tiles; f32 math,
    # store back in the output's native dtype.
    o_ref[...] = (x_ref[...].astype(jnp.float32) * g_ref[...]).astype(o_ref.dtype)


# ---------------------------------------------------------------------------
# wrapper
# ---------------------------------------------------------------------------

def srm_with_corr_matrix(x, w_cfc, gamma, beta, *, stats_n_tile=None,
                         apply_n_tile=None):
    """Forward pass of SRMWithCorrMatrix.

    x:     (B, C, H, W), any float dtype (kept native end to end)
    w_cfc: (C, 1, C+2) or (C, C+2) depthwise Conv1d weight (groups=C, no bias)
    gamma: (C,) BatchNorm1d weight;  beta: (C,) BatchNorm1d bias
    """
    B, C, H, W = x.shape
    N = H * W
    total = B * C * N
    itemsize = jnp.dtype(x.dtype).itemsize

    # Keep x in its native dtype (no wrapper-level f32 copy pass).
    x3 = x.reshape(B, C, N)

    # Zero-pad the spatial (lane) axis to a 128 multiple: exact for the
    # sum/sumsq/Gram reductions (normalisation uses the true N); the gate-apply
    # output is sliced back afterwards.
    N_pad = N if N % 128 == 0 else _round_up(N, 128)
    if N_pad != N:
        x3 = jnp.pad(x3, ((0, 0), (0, 0), (0, N_pad - N)))

    # Pre-split the depthwise conv weight in the wrapper (free layout plumbing).
    w = w_cfc.reshape(C, C + 2).astype(jnp.float32)
    w_mean = w[:, 0:1]                                    # (C, 1)
    w_std = w[:, 1:2]                                     # (C, 1)
    w_gram = w[:, 2:]                                     # (C, C)

    use_bf16_mxu = (C >= 64) or (x.dtype != jnp.float32)

    # ---- per-generation VMEM budgets ----------------------------------------
    vmem_cap = _vmem_capacity_bytes()
    vmem_limit = int(min(0.75 * vmem_cap, 100 << 20))     # ~48 MiB v7x, ~96 MiB v5e/v6e

    stats_fixed = (2 * _padded_bytes((C, C), 4)           # gram scratch + w_gram
                   + 4 * _padded_bytes((C, 1), 4)         # sum/sumsq + w_mean/w_std
                   + (4 << 20))                           # compiler-internal headroom
    stats_budget = max(min(vmem_limit - stats_fixed, 32 << 20), 1 << 20)
    if (stats_n_tile is None or stats_n_tile <= 0
            or N_pad % stats_n_tile != 0 or stats_n_tile % 128 != 0):
        stats_n_tile = _pick_lane_tile(N_pad, C, itemsize, stats_budget,
                                       n_buffers=2)
    nt_s = N_pad // stats_n_tile

    # ---- kernel 1: streamed per-b statistics -> z = cfc([mean, std, gram]) --
    # TODO(synk): verify via pl.lower_as_mlir that the A@A^T dot_general does
    # not insert a per-tile XLU transpose at very large C / n_tile.
    z = pl.pallas_call(
        functools.partial(_srm_stats_kernel, n_spatial=N, total_numel=total,
                          use_bf16_mxu=use_bf16_mxu),
        out_shape=jax.ShapeDtypeStruct((B, C, 1), jnp.float32),
        grid_spec=pltpu.PrefetchScalarGridSpec(
            num_scalar_prefetch=0,
            grid=(B, nt_s),
            in_specs=[
                pl.BlockSpec((1, C, stats_n_tile), lambda b, t: (b, 0, t)),
                pl.BlockSpec((C, 1), lambda b, t: (0, 0)),
                pl.BlockSpec((C, 1), lambda b, t: (0, 0)),
                pl.BlockSpec((C, C), lambda b, t: (0, 0)),
            ],
            out_specs=pl.BlockSpec((1, C, 1), lambda b, t: (b, 0, 0)),
            scratch_shapes=[
                pltpu.VMEM((C, 1), jnp.float32),          # running spatial sum
                pltpu.VMEM((C, 1), jnp.float32),          # running spatial sum of squares
                pltpu.VMEM((C, C), jnp.float32),          # running raw Gram (per b)
            ],
        ),
        compiler_params=pltpu.CompilerParams(
            dimension_semantics=("parallel", "arbitrary"),
            vmem_limit_bytes=vmem_limit,
        ),
        cost_estimate=pl.CostEstimate(
            flops=2 * B * C * C * N_pad + 4 * B * C * N_pad,
            transcendentals=0,
            bytes_accessed=itemsize * B * C * N_pad + 4 * (C * (C + 2) + B * C),
        ),
    )(x3, w_mean, w_std, w_gram)

    # ---- plain-JAX epilogue: BatchNorm1d (train mode) + sigmoid on B*C scalars
    # Hoisted out of the kernel so the stats grid stays B-parallel on v7x.
    # TODO(synk): BatchNorm1d running_mean / running_var buffer updates are
    # module state with no pure-kernel equivalent; only the train-mode forward
    # output (batch statistics) is reproduced here.
    z2 = z.reshape(B, C)
    mu = jnp.mean(z2, axis=0, keepdims=True)
    bvar = jnp.mean(jnp.square(z2 - mu), axis=0, keepdims=True)
    zhat = ((z2 - mu) * lax.rsqrt(bvar + 1e-5)
            * gamma.reshape(1, C).astype(jnp.float32)
            + beta.reshape(1, C).astype(jnp.float32))
    g = jax.nn.sigmoid(zhat).reshape(B * C, 1)            # (B*C, 1) f32

    # ---- kernel 2: sublane/lane-dense elementwise gate apply (in place) -----
    BC = B * C
    x2 = x3.reshape(BC, N_pad)
    tm = _pick_sublane_tile(BC)
    apply_budget = max(min(vmem_limit - (6 << 20), 48 << 20), 1 << 20)
    if (apply_n_tile is None or apply_n_tile <= 0
            or N_pad % apply_n_tile != 0 or apply_n_tile % 128 != 0):
        apply_n_tile = _pick_lane_tile(N_pad, tm, itemsize, apply_budget,
                                       n_buffers=4)       # in + out, double-buffered

    out = pl.pallas_call(
        _srm_apply_kernel,
        out_shape=jax.ShapeDtypeStruct((BC, N_pad), x.dtype),
        grid=(BC // tm, N_pad // apply_n_tile),
        in_specs=[
            pl.BlockSpec((tm, 1), lambda i, j: (i, 0)),
            pl.BlockSpec((tm, apply_n_tile), lambda i, j: (i, j)),
        ],
        out_specs=pl.BlockSpec((tm, apply_n_tile), lambda i, j: (i, j)),
        input_output_aliases={1: 0},                      # x is dead: reuse buffer
        compiler_params=pltpu.CompilerParams(
            dimension_semantics=("parallel", "parallel"),
            vmem_limit_bytes=vmem_limit,
        ),
        cost_estimate=pl.CostEstimate(
            flops=BC * N_pad,
            transcendentals=0,
            bytes_accessed=2 * itemsize * BC * N_pad + 4 * BC,
        ),
    )(g, x2)

    out = out.reshape(B, C, N_pad)
    if N_pad != N:
        out = out[:, :, :N]
    return out.reshape(B, C, H, W)


# ---------------------------------------------------------------------------
# pure-JAX reference (mirrors the PyTorch module, train-mode BatchNorm)
# ---------------------------------------------------------------------------

def _reference_forward(x, w_cfc, gamma, beta):
    B, C, H, W = x.shape
    xf = x.reshape(B, C, H * W).astype(jnp.float32)
    mean = jnp.mean(xf, axis=-1, keepdims=True)
    std = jnp.std(xf, axis=-1, keepdims=True, ddof=1)
    gram = jnp.einsum("bin,bjn->bij", xf, xf) / (B * C * H * W)
    u = jnp.concatenate([mean, std, gram], axis=-1)        # (B, C, C+2)
    w = w_cfc.reshape(C, C + 2).astype(jnp.float32)
    z = jnp.sum(u * w[None, :, :], axis=-1)                # (B, C)
    mu = jnp.mean(z, axis=0, keepdims=True)
    var = jnp.var(z, axis=0, keepdims=True)
    zhat = (z - mu) / jnp.sqrt(var + 1e-5) * gamma.reshape(1, C) + beta.reshape(1, C)
    g = jax.nn.sigmoid(zhat)
    return (xf.reshape(B, C, H, W) * g[:, :, None, None]).astype(x.dtype)


if __name__ == "__main__":
    B, C, H, W = 2, 4, 16, 16

    key = jax.random.PRNGKey(0)
    kx, kw = jax.random.split(key)

    x = jax.random.normal(kx, (B, C, H, W), dtype=jnp.float32)
    # Conv1d(C, C, kernel_size=C+2, groups=C, bias=False) weight: (C, 1, C+2).
    w_cfc = 0.1 * jax.random.normal(kw, (C, 1, C + 2), dtype=jnp.float32)
    # BatchNorm1d default affine init: weight = 1, bias = 0.
    gamma = jnp.ones((C,), dtype=jnp.float32)
    beta = jnp.zeros((C,), dtype=jnp.float32)

    # Force small tiles: N=256 runs as 2 streamed stats tiles per b and a
    # multi-block apply grid, exercising init / accumulate / finalize and the
    # 2D apply blocking end to end.
    fwd = jax.jit(functools.partial(srm_with_corr_matrix,
                                    stats_n_tile=128, apply_n_tile=128))
    out = fwd(x, w_cfc, gamma, beta)
    jax.block_until_ready(out)

    assert out.shape == (B, C, H, W), out.shape
    assert out.dtype == x.dtype, out.dtype

    ref = _reference_forward(x, w_cfc, gamma, beta)
    max_err = float(jnp.max(jnp.abs(out - ref)))
    assert max_err < 2e-4, f"mismatch vs reference: max abs err {max_err}"

    print("KERNEL_OK")
</pallas_src>

<mosaic_0001>
module attributes {stable_mosaic.version = 11 : i64} {
  func.func @_srm_apply_kernel(%arg0: i32, %arg1: i32, %arg2: memref<8x1xf32, #tpu.memory_space<vmem>>, %arg3: memref<8x128xf32, #tpu.memory_space<vmem>>, %arg4: memref<8x128xf32, #tpu.memory_space<vmem>>) attributes {dimension_semantics = [#tpu.dimension_semantics<parallel>, #tpu.dimension_semantics<parallel>], iteration_bounds = array<i64: 1, 2>, scalar_prefetch = 0 : i64, scratch_operands = 0 : i64, tpu.core_type = #tpu.core_type<tc>, window_params = [{transform_indices = @transform_0, window_bounds = array<i64: 8, 1>}, {transform_indices = @transform_1, window_bounds = array<i64: 8, 128>}, {transform_indices = @transform_2, window_bounds = array<i64: 8, 128>}]} {
    %c0 = arith.constant 0 : index
    %c0_0 = arith.constant 0 : index
    %0 = vector.load %arg3[%c0, %c0_0] : memref<8x128xf32, #tpu.memory_space<vmem>>, vector<8x128xf32>
    %c0_1 = arith.constant 0 : index
    %c0_2 = arith.constant 0 : index
    %1 = vector.load %arg2[%c0_1, %c0_2] : memref<8x1xf32, #tpu.memory_space<vmem>>, vector<8x1xf32>
    %2 = vector.broadcast %1 : vector<8x1xf32> to vector<8x128xf32>
    %3 = arith.mulf %0, %2 : vector<8x128xf32>
    %c0_3 = arith.constant 0 : index
    %c0_4 = arith.constant 0 : index
    %4 = vector.load %arg4[%c0_3, %c0_4] : memref<8x128xf32, #tpu.memory_space<vmem>>, vector<8x128xf32>
    tpu.vector_store %arg4[%c0_3, %c0_4], %3 {strides = array<i32>} : memref<8x128xf32, #tpu.memory_space<vmem>>, vector<8x128xf32>,
    return
  }
  func.func @transform_0(%arg0: i32, %arg1: i32) -> (i32, i32) {
    %c0_i32 = arith.constant 0 : i32
    %c0_i32_0 = arith.constant 0 : i32
    return %arg0, %c0_i32 : i32, i32
  }
  func.func @transform_1(%arg0: i32, %arg1: i32) -> (i32, i32) {
    %c0_i32 = arith.constant 0 : i32
    return %arg0, %arg1 : i32, i32
  }
  func.func @transform_2(%arg0: i32, %arg1: i32) -> (i32, i32) {
    %c0_i32 = arith.constant 0 : i32
    return %arg0, %arg1 : i32, i32
  }
}

module attributes {stable_mosaic.version = 11 : i64} {
  func.func @_srm_stats_kernel(%arg0: i32, %arg1: i32, %arg2: memref<1x4x128xf32, #tpu.memory_space<vmem>>, %arg3: memref<4x1xf32, #tpu.memory_space<vmem>>, %arg4: memref<4x1xf32, #tpu.memory_space<vmem>>, %arg5: memref<4x4xf32, #tpu.memory_space<vmem>>, %arg6: memref<1x4x1xf32, #tpu.memory_space<vmem>>, %arg7: memref<4x1xf32, #tpu.memory_space<vmem>>, %arg8: memref<4x1xf32, #tpu.memory_space<vmem>>, %arg9: memref<4x4xf32, #tpu.memory_space<vmem>>) attributes {dimension_semantics = [#tpu.dimension_semantics<parallel>, #tpu.dimension_semantics<arbitrary>], iteration_bounds = array<i64: 2, 2>, scalar_prefetch = 0 : i64, scratch_operands = 3 : i64, tpu.core_type = #tpu.core_type<tc>, window_params = [{transform_indices = @transform_0, window_bounds = array<i64: 1, 4, 128>}, {pipeline_mode = #tpu.pipeline_mode<synchronous>, transform_indices = @transform_1, window_bounds = array<i64: 4, 1>}, {pipeline_mode = #tpu.pipeline_mode<synchronous>, transform_indices = @transform_2, window_bounds = array<i64: 4, 1>}, {pipeline_mode = #tpu.pipeline_mode<synchronous>, transform_indices = @transform_3, window_bounds = array<i64: 4, 4>}, {transform_indices = @transform_4, window_bounds = array<i64: 1, 4, 1>}]} {
    %c0_i32 = arith.constant 0 : i32
    %0 = arith.cmpi eq, %arg1, %c0_i32 : i32
    %1 = arith.extui %0 : i1 to i32
    %c0_i32_0 = arith.constant 0 : i32
    %2 = arith.cmpi ne, %1, %c0_i32_0 : i32
    scf.if %2 {
      %cst_18 = arith.constant 0.000000e+00 : f32
      %23 = vector.broadcast %cst_18 : f32 to vector<4x1xf32>
      %c0_19 = arith.constant 0 : index
      %c0_20 = arith.constant 0 : index
      %24 = vector.load %arg7[%c0_19, %c0_20] : memref<4x1xf32, #tpu.memory_space<vmem>>, vector<4x1xf32>
      tpu.vector_store %arg7[%c0_19, %c0_20], %23 {strides = array<i32>} : memref<4x1xf32, #tpu.memory_space<vmem>>, vector<4x1xf32>,
      %cst_21 = arith.constant 0.000000e+00 : f32
      %25 = vector.broadcast %cst_21 : f32 to vector<4x1xf32>
      %c0_22 = arith.constant 0 : index
      %c0_23 = arith.constant 0 : index
      %26 = vector.load %arg8[%c0_22, %c0_23] : memref<4x1xf32, #tpu.memory_space<vmem>>, vector<4x1xf32>
      tpu.vector_store %arg8[%c0_22, %c0_23], %25 {strides = array<i32>} : memref<4x1xf32, #tpu.memory_space<vmem>>, vector<4x1xf32>,
      %cst_24 = arith.constant 0.000000e+00 : f32
      %27 = vector.broadcast %cst_24 : f32 to vector<4x4xf32>
      %c0_25 = arith.constant 0 : index
      %c0_26 = arith.constant 0 : index
      %28 = vector.load %arg9[%c0_25, %c0_26] : memref<4x4xf32, #tpu.memory_space<vmem>>, vector<4x4xf32>
      tpu.vector_store %arg9[%c0_25, %c0_26], %27 {strides = array<i32>} : memref<4x4xf32, #tpu.memory_space<vmem>>, vector<4x4xf32>,
    } else {
    }
    %c0 = arith.constant 0 : index
    %c0_1 = arith.constant 0 : index
    %c0_2 = arith.constant 0 : index
    %3 = vector.load %arg2[%c0, %c0_1, %c0_2] : memref<1x4x128xf32, #tpu.memory_space<vmem>>, vector<1x4x128xf32>
    %4 = vector.shape_cast %3 : vector<1x4x128xf32> to vector<4x128xf32>
    %c0_3 = arith.constant 0 : index
    %c0_4 = arith.constant 0 : index
    %5 = vector.load %arg7[%c0_3, %c0_4] : memref<4x1xf32, #tpu.memory_space<vmem>>, vector<4x1xf32>
    %cst = arith.constant dense<0.000000e+00> : vector<4xf32>
    %6 = vector.multi_reduction <add>, %4, %cst [1] : vector<4x128xf32> to vector<4xf32>
    %7 = vector.shape_cast %6 : vector<4xf32> to vector<4x1xf32>
    %8 = arith.addf %5, %7 : vector<4x1xf32>
    %c0_5 = arith.constant 0 : index
    %c0_6 = arith.constant 0 : index
    %9 = vector.load %arg7[%c0_5, %c0_6] : memref<4x1xf32, #tpu.memory_space<vmem>>, vector<4x1xf32>
    tpu.vector_store %arg7[%c0_5, %c0_6], %8 {strides = array<i32>} : memref<4x1xf32, #tpu.memory_space<vmem>>, vector<4x1xf32>,
    %c0_7 = arith.constant 0 : index
    %c0_8 = arith.constant 0 : index
    %10 = vector.load %arg8[%c0_7, %c0_8] : memref<4x1xf32, #tpu.memory_space<vmem>>, vector<4x1xf32>
    %11 = arith.mulf %4, %4 : vector<4x128xf32>
    %cst_9 = arith.constant dense<0.000000e+00> : vector<4xf32>
    %12 = vector.multi_reduction <add>, %11, %cst_9 [1] : vector<4x128xf32> to vector<4xf32>
    %13 = vector.shape_cast %12 : vector<4xf32> to vector<4x1xf32>
    %14 = arith.addf %10, %13 : vector<4x1xf32>
    %c0_10 = arith.constant 0 : index
    %c0_11 = arith.constant 0 : index
    %15 = vector.load %arg8[%c0_10, %c0_11] : memref<4x1xf32, #tpu.memory_space<vmem>>, vector<4x1xf32>
    tpu.vector_store %arg8[%c0_10, %c0_11], %14 {strides = array<i32>} : memref<4x1xf32, #tpu.memory_space<vmem>>, vector<4x1xf32>,
    %c0_12 = arith.constant 0 : index
    %c0_13 = arith.constant 0 : index
    %16 = vector.load %arg9[%c0_12, %c0_13] : memref<4x4xf32, #tpu.memory_space<vmem>>, vector<4x4xf32>
    %cst_14 = arith.constant dense<0.000000e+00> : vector<4x4xf32>
    %17 = tpu.matmul %4, %4, %cst_14 {dimension_numbers = #tpu.dot_dimension_numbers<[1], [1], [0], [0], [0, 0, 1, 0], [], []>} : vector<4x128xf32>, vector<4x128xf32>, vector<4x4xf32> -> vector<4x4xf32>
    %18 = arith.addf %16, %17 : vector<4x4xf32>
    %c0_15 = arith.constant 0 : index
    %c0_16 = arith.constant 0 : index
    %19 = vector.load %arg9[%c0_15, %c0_16] : memref<4x4xf32, #tpu.memory_space<vmem>>, vector<4x4xf32>
    tpu.vector_store %arg9[%c0_15, %c0_16], %18 {strides = array<i32>} : memref<4x4xf32, #tpu.memory_space<vmem>>, vector<4x4xf32>,
    %c1_i32 = arith.constant 1 : i32
    %20 = arith.cmpi eq, %arg1, %c1_i32 : i32
    %21 = arith.extui %20 : i1 to i32
    %c0_i32_17 = arith.constant 0 : i32
    %22 = arith.cmpi ne, %21, %c0_i32_17 : i32
    scf.if %22 {
      %c0_18 = arith.constant 0 : index
      %c0_19 = arith.constant 0 : index
      %23 = vector.load %arg7[%c0_18, %c0_19] : memref<4x1xf32, #tpu.memory_space<vmem>>, vector<4x1xf32>
      %cst_20 = arith.constant 3.906250e-03 : f32
      %24 = vector.broadcast %cst_20 : f32 to vector<4x1xf32>
      %25 = arith.mulf %23, %24 : vector<4x1xf32>
      %c0_21 = arith.constant 0 : index
      %c0_22 = arith.constant 0 : index
      %26 = vector.load %arg8[%c0_21, %c0_22] : memref<4x1xf32, #tpu.memory_space<vmem>>, vector<4x1xf32>
      %27 = arith.mulf %23, %25 : vector<4x1xf32>
      %28 = arith.subf %26, %27 : vector<4x1xf32>
      %cst_23 = arith.constant 0.000000e+00 : f32
      %29 = vector.broadcast %cst_23 : f32 to vector<4x1xf32>
      %30 = arith.maximumf %28, %29 : vector<4x1xf32>
      %cst_24 = arith.constant 0.00392156886 : f32
      %31 = vector.broadcast %cst_24 : f32 to vector<4x1xf32>
      %32 = arith.mulf %30, %31 : vector<4x1xf32>
      %33 = math.sqrt %32 : vector<4x1xf32>
      %c0_25 = arith.constant 0 : index
      %c0_26 = arith.constant 0 : index
      %34 = vector.load %arg9[%c0_25, %c0_26] : memref<4x4xf32, #tpu.memory_space<vmem>>, vector<4x4xf32>
      %cst_27 = arith.constant 4.8828125E-4 : f32
      %35 = vector.broadcast %cst_27 : f32 to vector<4x4xf32>
      %36 = arith.mulf %34, %35 : vector<4x4xf32>
      %c0_28 = arith.constant 0 : index
      %c0_29 = arith.constant 0 : index
      %37 = vector.load %arg3[%c0_28, %c0_29] : memref<4x1xf32, #tpu.memory_space<vmem>>, vector<4x1xf32>
      %38 = arith.mulf %25, %37 : vector<4x1xf32>
      %c0_30 = arith.constant 0 : index
      %c0_31 = arith.constant 0 : index
      %39 = vector.load %arg4[%c0_30, %c0_31] : memref<4x1xf32, #tpu.memory_space<vmem>>, vector<4x1xf32>
      %40 = arith.mulf %33, %39 : vector<4x1xf32>
      %41 = arith.addf %38, %40 : vector<4x1xf32>
      %c0_32 = arith.constant 0 : index
      %c0_33 = arith.constant 0 : index
      %42 = vector.load %arg5[%c0_32, %c0_33] : memref<4x4xf32, #tpu.memory_space<vmem>>, vector<4x4xf32>
      %43 = arith.mulf %36, %42 : vector<4x4xf32>
      %cst_34 = arith.constant dense<0.000000e+00> : vector<4xf32>
      %44 = vector.multi_reduction <add>, %43, %cst_34 [1] : vector<4x4xf32> to vector<4xf32>
      %45 = vector.shape_cast %44 : vector<4xf32> to vector<4x1xf32>
      %46 = arith.addf %41, %45 : vector<4x1xf32>
      %c0_35 = arith.constant 0 : index
      %c0_36 = arith.constant 0 : index
      %c0_37 = arith.constant 0 : index
      %47 = vector.load %arg6[%c0_35, %c0_36, %c0_37] : memref<1x4x1xf32, #tpu.memory_space<vmem>>, vector<1x4x1xf32>
      %48 = vector.shape_cast %47 : vector<1x4x1xf32> to vector<4x1xf32>
      %49 = vector.shape_cast %46 : vector<4x1xf32> to vector<1x4x1xf32>
      tpu.vector_store %arg6[%c0_35, %c0_36, %c0_37], %49 {strides = array<i32>} : memref<1x4x1xf32, #tpu.memory_space<vmem>>, vector<1x4x1xf32>,
    } else {
    }
    return
  }
  func.func @transform_0(%arg0: i32, %arg1: i32) -> (i32, i32, i32) {
    %c0_i32 = arith.constant 0 : i32
    %c0_i32_0 = arith.constant 0 : i32
    return %arg0, %c0_i32, %arg1 : i32, i32, i32
  }
  func.func @transform_1(%arg0: i32, %arg1: i32) -> (i32, i32) {
    %c0_i32 = arith.constant 0 : i32
    %c0_i32_0 = arith.constant 0 : i32
    %c0_i32_1 = arith.constant 0 : i32
    return %c0_i32, %c0_i32_0 : i32, i32
  }
  func.func @transform_2(%arg0: i32, %arg1: i32) -> (i32, i32) {
    %c0_i32 = arith.constant 0 : i32
    %c0_i32_0 = arith.constant 0 : i32
    %c0_i32_1 = arith.constant 0 : i32
    return %c0_i32, %c0_i32_0 : i32, i32
  }
  func.func @transform_3(%arg0: i32, %arg1: i32) -> (i32, i32) {
    %c0_i32 = arith.constant 0 : i32
    %c0_i32_0 = arith.constant 0 : i32
    %c0_i32_1 = arith.constant 0 : i32
    return %c0_i32, %c0_i32_0 : i32, i32
  }
  func.func @transform_4(%arg0: i32, %arg1: i32) -> (i32, i32, i32) {
    %c0_i32 = arith.constant 0 : i32
    %c0_i32_0 = arith.constant 0 : i32
    %c0_i32_1 = arith.constant 0 : i32
    return %arg0, %c0_i32, %c0_i32_0 : i32, i32, i32
  }
}

</mosaic_0001>

<llo_original>
// kernel: srm_with_corr_matrix.3
$region0: #{srm_with_corr_matrix.3}
  #allocation0 [shape = 'u32[]', space=smem, size = 0x4, offset = 0x4, fixed_abs, tag = 'smem constant byte address 0x4 - core index']
  #allocation1 [shape = 'u32[144,128]{1,0:T(1,128)}', space=vmem, size = 0x12000, scoped, tag = 'internal scratch']
  %s0 = inlined_call_operand.vmem [shape: f32[8,1], index: 0, kind: input, shape index: {}]
  %s1 = inlined_call_operand.vmem [shape: f32[8,256], index: 1, kind: input, shape index: {}, may-alias: {1,2}]
  %s2 = inlined_call_operand.vmem [shape: f32[8,256], index: 2, kind: output, shape index: {}, may-alias: {1,2}]
  %s3 = sld [smem:[#allocation0]]
  $region41: #{srm_with_corr_matrix.3} parent=0
    _
  %s5 = ssub.s32 1, %s3
  %s6 = scalar_select 0, %s5, %s3
  loop: start=0, step=1, limit=4
  $region2: #{srm_with_corr_matrix.3} parent=0 // loop_pre_header
    _
  $region3: #{srm_with_corr_matrix.3} parent=0 // loop_header
    %s8 = sphi 0, %s12
    %p9 = scmp.ge.s32.totalorder %s8, 4
    %s15 = sphi 0, %s27
    %s16 = sphi 0, %s23
    %s17 = sphi 0, %s15
    %s18 = sphi 0, %s16
    %s19 = sphi 0, %s17
    %s20 = sphi 0, %s18
    %s30 = sphi 0, %s32
    %s33 = sphi 0, %s30
    %s34 = sphi 0, %s33
    %s50 = sphi 0, %s34
    %s58 = sphi 0, %s60
    %s61 = sphi 0, %s58
    %s62 = sphi 0, %s61
    %s78 = sphi 0, %s62
    %s86 = sphi 0, %s88
    %s89 = sphi 0, %s86
    %s90 = sphi 0, %s89
    %s106 = sphi 0, %s90
  $region4: #{srm_with_corr_matrix.3} parent=0 // loop_header_branch
    %11 = sbr.rel (%p9) target = $region8
  $region5: #{srm_with_corr_matrix.3} parent=0 // loop_body
    %s13 = ssub.s32 %s8, 1
    %s14 = ssub.s32 %s8, 2
    %s21 = sadd.s32 1, %s16
    %p22 = scmp.ge.s32.totalorder %s21, 2
    %s23 = scalar_select %p22, 0, %s21
    %s24 = sadd.s32 1, %s15
    %s25 = scalar_select %p22, %s24, %s15
    %p26 = scmp.ge.s32.totalorder %s25, 1
    %s27 = scalar_select %p26, 0, %s25
    %s28 = ssub.s32 %s15, %s27
    %p29 = scmp.eq.s32.totalorder %s28, 0
    %s31 = sadd.s32 %s30, 1
    %s32 = scalar_select %p29, %s30, %s31
    %p35 = pneg %p29
    %p36 = scmp.eq.s32.totalorder %s8, 1
    %p37 = por %p35, %p36
    %p38 = scmp.ne.s32.totalorder %s30, %s33
    %p39 = scmp.eq.s32.totalorder %s8, 0
    %p40 = por %p38, %p39
    %p41 = scmp.ne.s32.totalorder %s30, %s33
    %p42 = scmp.eq.s32.totalorder %s13, 1
    %p43 = por %p41, %p42
    %p44 = scmp.ne.s32.totalorder %s33, %s34
    %p45 = scmp.eq.s32.totalorder %s13, 0
    %p46 = por %p44, %p45
    %p47 = scmp.ne.s32.totalorder %s33, %s34
    %p48 = scmp.eq.s32.totalorder %s14, 1
    %p49 = por %p47, %p48
    %p51 = scmp.ne.s32.totalorder %s34, %s50
    %p52 = scmp.eq.s32.totalorder %s14, 0
    %p53 = por %p51, %p52
    %s54 = ssub.s32 %s15, %s27
    %s55 = ssub.s32 %s16, %s23
    %s56 = sor.u32 %s54, %s55
    %p57 = scmp.eq.s32.totalorder %s56, 0
    %s59 = sadd.s32 %s58, 1
    %s60 = scalar_select %p57, %s58, %s59
    %p63 = pneg %p57
    %p64 = scmp.eq.s32.totalorder %s8, 1
    %p65 = por %p63, %p64
    %p66 = scmp.ne.s32.totalorder %s58, %s61
    %p67 = scmp.eq.s32.totalorder %s8, 0
    %p68 = por %p66, %p67
    %p69 = scmp.ne.s32.totalorder %s58, %s61
    %p70 = scmp.eq.s32.totalorder %s13, 1
    %p71 = por %p69, %p70
    %p72 = scmp.ne.s32.totalorder %s61, %s62
    %p73 = scmp.eq.s32.totalorder %s13, 0
    %p74 = por %p72, %p73
    %p75 = scmp.ne.s32.totalorder %s61, %s62
    %p76 = scmp.eq.s32.totalorder %s14, 1
    %p77 = por %p75, %p76
    %p79 = scmp.ne.s32.totalorder %s62, %s78
    %p80 = scmp.eq.s32.totalorder %s14, 0
    %p81 = por %p79, %p80
    %s82 = ssub.s32 %s15, %s27
    %s83 = ssub.s32 %s16, %s23
    %s84 = sor.u32 %s82, %s83
    %p85 = scmp.eq.s32.totalorder %s84, 0
    %s87 = sadd.s32 %s86, 1
    %s88 = scalar_select %p85, %s86, %s87
    %p91 = pneg %p85
    %p92 = scmp.eq.s32.totalorder %s8, 1
    %p93 = por %p91, %p92
    %p94 = scmp.ne.s32.totalorder %s86, %s89
    %p95 = scmp.eq.s32.totalorder %s8, 0
    %p96 = por %p94, %p95
    %p97 = scmp.ne.s32.totalorder %s86, %s89
    %p98 = scmp.eq.s32.totalorder %s13, 1
    %p99 = por %p97, %p98
    %p100 = scmp.ne.s32.totalorder %s89, %s90
    %p101 = scmp.eq.s32.totalorder %s13, 0
    %p102 = por %p100, %p101
    %p103 = scmp.ne.s32.totalorder %s89, %s90
    %p104 = scmp.eq.s32.totalorder %s14, 1
    %p105 = por %p103, %p104
    %p107 = scmp.ne.s32.totalorder %s90, %s106
    %p108 = scmp.eq.s32.totalorder %s14, 0
    %p109 = por %p107, %p108
    %p110 = scmp.le.s32.totalorder 1, %s8
    %p111 = scmp.lt.s32.totalorder %s8, 3
    %p112 = pnand %p110, %p111
    %p113 = pneg %p112
    // Predicated region
    $region9: #{srm_with_corr_matrix.3} parent=5 // pred_check
      _
    $region10: #{srm_with_corr_matrix.3} parent=5 // pred_check_branch
      %115 = sbr.rel (%p112) target = $region12
    $region11: #{srm_with_corr_matrix.3} parent=5 // pred_region
      %s116 = ssub.s32 %s8, 1
      // Predicated region
      $region13: #{srm_with_corr_matrix.3} parent=11 // pred_check
        %p117 = pneg %p46
      $region14: #{srm_with_corr_matrix.3} parent=11 // pred_check_branch
        %119 = sbr.rel (%p117) target = $region16
      $region15: #{srm_with_corr_matrix.3} parent=11 // pred_region
        %p120 = scmp.lt.s32.totalorder %s17, 0
        %s121 = scalar_select %p120, %s17, 0
        %s122 = smul.addr %s121, 8
        %s123 = scalar_lea.vmem %s0, %s122
      $region16: #{srm_with_corr_matrix.3} parent=11 // pred_fallthru
        _
    $region12: #{srm_with_corr_matrix.3} parent=5 // pred_fallthru
      _
    %p124 = scmp.lt.s32.totalorder %s8, 2
    // Predicated region
    $region17: #{srm_with_corr_matrix.3} parent=5 // pred_check
      %p125 = pneg %p124
    $region18: #{srm_with_corr_matrix.3} parent=5 // pred_check_branch
      %127 = sbr.rel (%p125) target = $region20
    $region19: #{srm_with_corr_matrix.3} parent=5 // pred_region
      // Predicated region
      $region21: #{srm_with_corr_matrix.3} parent=19 // pred_check
        %p128 = pneg %p68
      $region22: #{srm_with_corr_matrix.3} parent=19 // pred_check_branch
        %130 = sbr.rel (%p128) target = $region24
      $region23: #{srm_with_corr_matrix.3} parent=19 // pred_region
        %p131 = scmp.lt.s32.totalorder %s15, 0
        %s132 = scalar_select %p131, %s15, 0
        %p133 = scmp.lt.s32.totalorder %s16, 1
        %s134 = scalar_select %p133, %s16, 1
        %s135 = smul.addr %s132, 2
        %s136 = sadd.s32 %s134, %s135
        %s137 = smul.addr %s136, 8
        %s138 = scalar_lea.vmem %s1, %s137
      $region24: #{srm_with_corr_matrix.3} parent=19 // pred_fallthru
        _
    $region20: #{srm_with_corr_matrix.3} parent=5 // pred_fallthru
      _
    %p139 = scmp.le.s32.totalorder 1, %s8
    %p140 = scmp.lt.s32.totalorder %s8, 3
    %p141 = pnand %p139, %p140
    %p142 = pneg %p141
    // Predicated region
    $region25: #{srm_with_corr_matrix.3} parent=5 // pred_check
      _
    $region26: #{srm_with_corr_matrix.3} parent=5 // pred_check_branch
      %144 = sbr.rel (%p141) target = $region28
    $region27: #{srm_with_corr_matrix.3} parent=5 // pred_region
      %s145 = ssub.s32 %s8, 1
      %p146 = scmp.lt.s32.totalorder %s17, 0
      %s147 = scalar_select %p146, %s17, 0
      %s148 = smul.addr %s147, 8
      %s149 = scalar_lea.vmem %s0, %s148
      %p150 = pneg %p46
      %p151 = pneg %p43
      %p152 = scmp.lt.s32.totalorder %s17, 0
      %s153 = scalar_select %p152, %s17, 0
      %p154 = scmp.lt.s32.totalorder %s18, 1
      %s155 = scalar_select %p154, %s18, 1
      %s156 = smul.addr %s153, 2
      %s157 = sadd.s32 %s155, %s156
      %s158 = smul.addr %s157, 8
      %s159 = scalar_lea.vmem %s1, %s158
      %p160 = pneg %p74
      %p161 = pneg %p71
      %p162 = pneg %p102
      %p163 = pneg %p99
      %p164 = scmp.lt.s32.totalorder %s17, 0
      %s165 = scalar_select %p164, %s17, 0
      %p166 = scmp.lt.s32.totalorder %s18, 1
      %s167 = scalar_select %p166, %s18, 1
      %s168 = smul.addr %s165, 2
      %s169 = sadd.s32 %s167, %s168
      %s170 = smul.addr %s169, 8
      %s171 = scalar_lea.vmem %s2, %s170
      %p172 = scmp.lt.s32.totalorder %s17, 0
      %s173 = scalar_select %p172, %s17, 0
      %s174 = smul.addr %s173, 8
      %s175 = scalar_lea.vmem %s0, %s174
      %p176 = scmp.lt.s32.totalorder %s17, 0
      %s177 = scalar_select %p176, %s17, 0
      %p178 = scmp.lt.s32.totalorder %s18, 1
      %s179 = scalar_select %p178, %s18, 1
      %s180 = smul.addr %s177, 2
      %s181 = sadd.s32 %s179, %s180
      %s182 = smul.addr %s181, 8
      %s183 = scalar_lea.vmem %s1, %s182
      %p184 = scmp.lt.s32.totalorder %s17, 0
      %s185 = scalar_select %p184, %s17, 0
      %p186 = scmp.lt.s32.totalorder %s18, 1
      %s187 = scalar_select %p186, %s18, 1
      %s188 = smul.addr %s185, 2
      %s189 = sadd.s32 %s187, %s188
      %s190 = smul.addr %s189, 8
      %s191 = scalar_lea.vmem %s2, %s190
      %v192 = vld [vmem:[%s183] sm:$0xff]
      %v193 = vld [vmem:[%s175] sm:$0xff]
      %195 = vset.pattern.permute.xlu0 0
      %196 = vperm.xlu0 %195, %v193
      %v197 = vpop.permute.xlu0 %196
      %v199 = vmul.f32 %v192, %v197
      %200 = vst [vmem:[%s191] sm:$0xff] %v199
      %p201 = scmp.lt.s32.totalorder %s17, 0
      %s202 = scalar_select %p201, %s17, 0
      %p203 = scmp.lt.s32.totalorder %s18, 1
      %s204 = scalar_select %p203, %s18, 1
      %s205 = smul.addr %s202, 2
      %s206 = sadd.s32 %s204, %s205
      %s207 = smul.addr %s206, 8
      %s208 = scalar_lea.vmem %s2, %s207
      // Predicated region
      $region29: #{srm_with_corr_matrix.3} parent=27 // pred_check
        %p209 = pneg %p99
      $region30: #{srm_with_corr_matrix.3} parent=27 // pred_check_branch
        %211 = sbr.rel (%p209) target = $region32
      $region31: #{srm_with_corr_matrix.3} parent=27 // pred_region
        _
      $region32: #{srm_with_corr_matrix.3} parent=27 // pred_fallthru
        _
    $region28: #{srm_with_corr_matrix.3} parent=5 // pred_fallthru
      _
    %p212 = scmp.le.s32.totalorder 2, %s8
    // Predicated region
    $region33: #{srm_with_corr_matrix.3} parent=5 // pred_check
      %p213 = pneg %p212
    $region34: #{srm_with_corr_matrix.3} parent=5 // pred_check_branch
      %215 = sbr.rel (%p213) target = $region36
    $region35: #{srm_with_corr_matrix.3} parent=5 // pred_region
      %s216 = ssub.s32 %s8, 2
      // Predicated region
      $region37: #{srm_with_corr_matrix.3} parent=35 // pred_check
        %p217 = pneg %p105
      $region38: #{srm_with_corr_matrix.3} parent=35 // pred_check_branch
        %219 = sbr.rel (%p217) target = $region40
      $region39: #{srm_with_corr_matrix.3} parent=35 // pred_region
        %p220 = scmp.lt.s32.totalorder %s19, 0
        %s221 = scalar_select %p220, %s19, 0
        %p222 = scmp.lt.s32.totalorder %s20, 1
        %s223 = scalar_select %p222, %s20, 1
        %s224 = smul.addr %s221, 2
        %s225 = sadd.s32 %s223, %s224
        %s226 = smul.addr %s225, 8
        %s227 = scalar_lea.vmem %s2, %s226
      $region40: #{srm_with_corr_matrix.3} parent=35 // pred_fallthru
        _
    $region36: #{srm_with_corr_matrix.3} parent=5 // pred_fallthru
      _
  $region6: #{srm_with_corr_matrix.3} parent=0 // loop_footer
    %s12 = sadd.s32 1, %s8
  $region7: #{srm_with_corr_matrix.3} parent=0 // loop_footer_branch
    %7 = sbr.rel target = $region3
  $region8: #{srm_with_corr_matrix.3} parent=0 // loop_exit
    _

// kernel: srm_with_corr_matrix.2
$region0: #{srm_with_corr_matrix.2}
  #allocation0 [shape = 'u32[]', space=smem, size = 0x4, offset = 0x4, fixed_abs, tag = 'smem constant byte address 0x4 - core index']
  #allocation1 [shape = 'u32[144,128]{1,0:T(1,128)}', space=vmem, size = 0x12000, scoped, tag = 'internal scratch']
  #allocation2 [shape = 'f32[4,1]{1,0:T(4,128)}', space=vmem, size = 0x800, scoped, tag = 'scratch operand']
  #allocation3 [shape = 'f32[4,1]{1,0:T(4,128)}', space=vmem, size = 0x800, scoped, tag = 'scratch operand']
  #allocation4 [shape = 'f32[4,4]{1,0:T(4,128)}', space=vmem, size = 0x800, scoped, tag = 'scratch operand']
  %s0 = inlined_call_operand.vmem [shape: f32[2,4,256], index: 0, kind: input, shape index: {}]
  %s1 = inlined_call_operand.vmem [shape: f32[4,1], index: 1, kind: input, shape index: {}]
  %s2 = inlined_call_operand.vmem [shape: f32[4,1], index: 2, kind: input, shape index: {}]
  %s3 = inlined_call_operand.vmem [shape: f32[4,4], index: 3, kind: input, shape index: {}]
  %s4 = inlined_call_operand.vmem [shape: f32[2,4,1], index: 4, kind: output, shape index: {}]
  %s5 = sld [smem:[#allocation0]]
  $region57: #{srm_with_corr_matrix.2} parent=0
    _
  %s7 = ssub.s32 1, %s5
  %s8 = scalar_select 0, %s7, %s5
  loop: start=0, step=1, limit=6
  $region2: #{srm_with_corr_matrix.2} parent=0 // loop_pre_header
    _
  $region3: #{srm_with_corr_matrix.2} parent=0 // loop_header
    %s10 = sphi 0, %s14
    %p11 = scmp.ge.s32.totalorder %s10, 6
    %s17 = sphi 0, %s29
    %s18 = sphi 0, %s25
    %s19 = sphi 0, %s17
    %s20 = sphi 0, %s18
    %s21 = sphi 0, %s19
    %s22 = sphi 0, %s20
    %s34 = sphi 0, %s36
    %s37 = sphi 0, %s34
    %s38 = sphi 0, %s37
    %s54 = sphi 0, %s38
    %s58 = sphi 0, %s58
    %s60 = sphi 0, %s58
    %s61 = sphi 0, %s60
    %s75 = sphi 0, %s61
    %s79 = sphi 0, %s79
    %s81 = sphi 0, %s79
    %s82 = sphi 0, %s81
    %s96 = sphi 0, %s82
    %s100 = sphi 0, %s100
    %s102 = sphi 0, %s100
    %s103 = sphi 0, %s102
    %s117 = sphi 0, %s103
    %s123 = sphi 0, %s125
    %s126 = sphi 0, %s123
    %s127 = sphi 0, %s126
    %s143 = sphi 0, %s127
  $region4: #{srm_with_corr_matrix.2} parent=0 // loop_header_branch
    %13 = sbr.rel (%p11) target = $region8
  $region5: #{srm_with_corr_matrix.2} parent=0 // loop_body
    %s15 = ssub.s32 %s10, 1
    %s16 = ssub.s32 %s10, 2
    %s23 = sadd.s32 1, %s18
    %p24 = scmp.ge.s32.totalorder %s23, 2
    %s25 = scalar_select %p24, 0, %s23
    %s26 = sadd.s32 1, %s17
    %s27 = scalar_select %p24, %s26, %s17
    %p28 = scmp.ge.s32.totalorder %s27, 2
    %s29 = scalar_select %p28, 0, %s27
    %s30 = ssub.s32 %s17, %s29
    %s31 = ssub.s32 %s18, %s25
    %s32 = sor.u32 %s30, %s31
    %p33 = scmp.eq.s32.totalorder %s32, 0
    %s35 = sadd.s32 %s34, 1
    %s36 = scalar_select %p33, %s34, %s35
    %p39 = pneg %p33
    %p40 = scmp.eq.s32.totalorder %s10, 3
    %p41 = por %p39, %p40
    %p42 = scmp.ne.s32.totalorder %s34, %s37
    %p43 = scmp.eq.s32.totalorder %s10, 0
    %p44 = por %p42, %p43
    %p45 = scmp.ne.s32.totalorder %s34, %s37
    %p46 = scmp.eq.s32.totalorder %s15, 3
    %p47 = por %p45, %p46
    %p48 = scmp.ne.s32.totalorder %s37, %s38
    %p49 = scmp.eq.s32.totalorder %s15, 0
    %p50 = por %p48, %p49
    %p51 = scmp.ne.s32.totalorder %s37, %s38
    %p52 = scmp.eq.s32.totalorder %s16, 3
    %p53 = por %p51, %p52
    %p55 = scmp.ne.s32.totalorder %s38, %s54
    %p56 = scmp.eq.s32.totalorder %s16, 0
    %p57 = por %p55, %p56
    %s59 = sadd.s32 %s58, 1
    %p62 = scmp.eq.s32.totalorder %s10, 3
    %p63 = scmp.ne.s32.totalorder %s58, %s60
    %p64 = scmp.eq.s32.totalorder %s10, 0
    %p65 = por %p63, %p64
    %p66 = scmp.ne.s32.totalorder %s58, %s60
    %p67 = scmp.eq.s32.totalorder %s15, 3
    %p68 = por %p66, %p67
    %p69 = scmp.ne.s32.totalorder %s60, %s61
    %p70 = scmp.eq.s32.totalorder %s15, 0
    %p71 = por %p69, %p70
    %p72 = scmp.ne.s32.totalorder %s60, %s61
    %p73 = scmp.eq.s32.totalorder %s16, 3
    %p74 = por %p72, %p73
    %p76 = scmp.ne.s32.totalorder %s61, %s75
    %p77 = scmp.eq.s32.totalorder %s16, 0
    %p78 = por %p76, %p77
    %s80 = sadd.s32 %s79, 1
    %p83 = scmp.eq.s32.totalorder %s10, 3
    %p84 = scmp.ne.s32.totalorder %s79, %s81
    %p85 = scmp.eq.s32.totalorder %s10, 0
    %p86 = por %p84, %p85
    %p87 = scmp.ne.s32.totalorder %s79, %s81
    %p88 = scmp.eq.s32.totalorder %s15, 3
    %p89 = por %p87, %p88
    %p90 = scmp.ne.s32.totalorder %s81, %s82
    %p91 = scmp.eq.s32.totalorder %s15, 0
    %p92 = por %p90, %p91
    %p93 = scmp.ne.s32.totalorder %s81, %s82
    %p94 = scmp.eq.s32.totalorder %s16, 3
    %p95 = por %p93, %p94
    %p97 = scmp.ne.s32.totalorder %s82, %s96
    %p98 = scmp.eq.s32.totalorder %s16, 0
    %p99 = por %p97, %p98
    %s101 = sadd.s32 %s100, 1
    %p104 = scmp.eq.s32.totalorder %s10, 3
    %p105 = scmp.ne.s32.totalorder %s100, %s102
    %p106 = scmp.eq.s32.totalorder %s10, 0
    %p107 = por %p105, %p106
    %p108 = scmp.ne.s32.totalorder %s100, %s102
    %p109 = scmp.eq.s32.totalorder %s15, 3
    %p110 = por %p108, %p109
    %p111 = scmp.ne.s32.totalorder %s102, %s103
    %p112 = scmp.eq.s32.totalorder %s15, 0
    %p113 = por %p111, %p112
    %p114 = scmp.ne.s32.totalorder %s102, %s103
    %p115 = scmp.eq.s32.totalorder %s16, 3
    %p116 = por %p114, %p115
    %p118 = scmp.ne.s32.totalorder %s103, %s117
    %p119 = scmp.eq.s32.totalorder %s16, 0
    %p120 = por %p118, %p119
    %s121 = ssub.s32 %s17, %s29
    %p122 = scmp.eq.s32.totalorder %s121, 0
    %s124 = sadd.s32 %s123, 1
    %s125 = scalar_select %p122, %s123, %s124
    %p128 = pneg %p122
    %p129 = scmp.eq.s32.totalorder %s10, 3
    %p130 = por %p128, %p129
    %p131 = scmp.ne.s32.totalorder %s123, %s126
    %p132 = scmp.eq.s32.totalorder %s10, 0
    %p133 = por %p131, %p132
    %p134 = scmp.ne.s32.totalorder %s123, %s126
    %p135 = scmp.eq.s32.totalorder %s15, 3
    %p136 = por %p134, %p135
    %p137 = scmp.ne.s32.totalorder %s126, %s127
    %p138 = scmp.eq.s32.totalorder %s15, 0
    %p139 = por %p137, %p138
    %p140 = scmp.ne.s32.totalorder %s126, %s127
    %p141 = scmp.eq.s32.totalorder %s16, 3
    %p142 = por %p140, %p141
    %p144 = scmp.ne.s32.totalorder %s127, %s143
    %p145 = scmp.eq.s32.totalorder %s16, 0
    %p146 = por %p144, %p145
    %p147 = scmp.le.s32.totalorder 1, %s10
    %p148 = scmp.lt.s32.totalorder %s10, 5
    %p149 = pnand %p147, %p148
    %p150 = pneg %p149
    // Predicated region
    $region9: #{srm_with_corr_matrix.2} parent=5 // pred_check
      _
    $region10: #{srm_with_corr_matrix.2} parent=5 // pred_check_branch
      %152 = sbr.rel (%p149) target = $region12
    $region11: #{srm_with_corr_matrix.2} parent=5 // pred_region
      %s153 = ssub.s32 %s10, 1
      // Predicated region
      $region13: #{srm_with_corr_matrix.2} parent=11 // pred_check
        %p154 = pneg %p71
      $region14: #{srm_with_corr_matrix.2} parent=11 // pred_check_branch
        %156 = sbr.rel (%p154) target = $region16
      $region15: #{srm_with_corr_matrix.2} parent=11 // pred_region
        _
      $region16: #{srm_with_corr_matrix.2} parent=11 // pred_fallthru
        _
      // Predicated region
      $region17: #{srm_with_corr_matrix.2} parent=11 // pred_check
        %p157 = pneg %p92
      $region18: #{srm_with_corr_matrix.2} parent=11 // pred_check_branch
        %159 = sbr.rel (%p157) target = $region20
      $region19: #{srm_with_corr_matrix.2} parent=11 // pred_region
        _
      $region20: #{srm_with_corr_matrix.2} parent=11 // pred_fallthru
        _
      // Predicated region
      $region21: #{srm_with_corr_matrix.2} parent=11 // pred_check
        %p160 = pneg %p113
      $region22: #{srm_with_corr_matrix.2} parent=11 // pred_check_branch
        %162 = sbr.rel (%p160) target = $region24
      $region23: #{srm_with_corr_matrix.2} parent=11 // pred_region
        _
      $region24: #{srm_with_corr_matrix.2} parent=11 // pred_fallthru
        _
    $region12: #{srm_with_corr_matrix.2} parent=5 // pred_fallthru
      _
    %p163 = scmp.lt.s32.totalorder %s10, 4
    // Predicated region
    $region25: #{srm_with_corr_matrix.2} parent=5 // pred_check
      %p164 = pneg %p163
    $region26: #{srm_with_corr_matrix.2} parent=5 // pred_check_branch
      %166 = sbr.rel (%p164) target = $region28
    $region27: #{srm_with_corr_matrix.2} parent=5 // pred_region
      // Predicated region
      $region29: #{srm_with_corr_matrix.2} parent=27 // pred_check
        %p167 = pneg %p44
      $region30: #{srm_with_corr_matrix.2} parent=27 // pred_check_branch
        %169 = sbr.rel (%p167) target = $region32
      $region31: #{srm_with_corr_matrix.2} parent=27 // pred_region
        %p170 = scmp.lt.s32.totalorder %s17, 1
        %s171 = scalar_select %p170, %s17, 1
        %p172 = scmp.lt.s32.totalorder %s18, 1
        %s173 = scalar_select %p172, %s18, 1
        %s174 = smul.addr %s171, 2
        %s175 = sadd.s32 %s173, %s174
        %s176 = smul.addr %s175, 4
        %s177 = scalar_lea.vmem %s0, %s176
      $region32: #{srm_with_corr_matrix.2} parent=27 // pred_fallthru
        _
    $region28: #{srm_with_corr_matrix.2} parent=5 // pred_fallthru
      _
    %p178 = scmp.le.s32.totalorder 1, %s10
    %p179 = scmp.lt.s32.totalorder %s10, 5
    %p180 = pnand %p178, %p179
    %p181 = pneg %p180
    // Predicated region
    $region33: #{srm_with_corr_matrix.2} parent=5 // pred_check
      _
    $region34: #{srm_with_corr_matrix.2} parent=5 // pred_check_branch
      %183 = sbr.rel (%p180) target = $region36
    $region35: #{srm_with_corr_matrix.2} parent=5 // pred_region
      %s184 = ssub.s32 %s10, 1
      %p185 = scmp.lt.s32.totalorder %s19, 1
      %s186 = scalar_select %p185, %s19, 1
      %p187 = scmp.lt.s32.totalorder %s20, 1
      %s188 = scalar_select %p187, %s20, 1
      %s189 = smul.addr %s186, 2
      %s190 = sadd.s32 %s188, %s189
      %s191 = smul.addr %s190, 4
      %s192 = scalar_lea.vmem %s0, %s191
      %p193 = pneg %p50
      %p194 = pneg %p47
      %p195 = pneg %p71
      %p196 = pneg %p68
      %p197 = pneg %p92
      %p198 = pneg %p89
      %p199 = pneg %p113
      %p200 = pneg %p110
      %p201 = pneg %p139
      %p202 = pneg %p136
      %p203 = scmp.lt.s32.totalorder %s19, 1
      %s204 = scalar_select %p203, %s19, 1
      %s205 = smul.addr %s204, 4
      %s206 = scalar_lea.vmem %s4, %s205
      %p207 = scmp.lt.s32.totalorder %s19, 1
      %s208 = scalar_select %p207, %s19, 1
      %p209 = scmp.lt.s32.totalorder %s20, 1
      %s210 = scalar_select %p209, %s20, 1
      %s211 = smul.addr %s208, 2
      %s212 = sadd.s32 %s210, %s211
      %s213 = smul.addr %s212, 4
      %s214 = scalar_lea.vmem %s0, %s213
      %p215 = scmp.lt.s32.totalorder %s19, 1
      %s216 = scalar_select %p215, %s19, 1
      %s217 = smul.addr %s216, 4
      %s218 = scalar_lea.vmem %s4, %s217
      %p219 = scmp.eq.s32.totalorder %s20, 0
      // Predicated region
      $region37: #{srm_with_corr_matrix.2} parent=35 // pred_check
        %p220 = pneg %p219
      $region38: #{srm_with_corr_matrix.2} parent=35 // pred_check_branch
        %222 = sbr.rel (%p220) target = $region40
      $region39: #{srm_with_corr_matrix.2} parent=35 // pred_region
        %vm223 = vcmask 3072
        %224 = vst.msk [vmem:[#allocation2] sm:$0xf] %vm223, 0.0
        %225 = vst.msk [vmem:[#allocation3] sm:$0xf] %vm223, 0.0
        %vm226 = vcmask 27648
        %227 = vst.msk [vmem:[#allocation4] sm:$0xf] %vm226, 0.0
      $region40: #{srm_with_corr_matrix.2} parent=35 // pred_fallthru
        _
      %v228 = vld [vmem:[%s214] sm:$0xf]
      %v229 = vld [vmem:[#allocation2] sm:$0xf]
      %vm230 = vcmask 1043456
      %v231 = vsel %vm230, %v228, 0.0
      %232 = vadd.xlane.f32.xlu0 %v231
      %v233 = vpop.xlane.xlu0 %232
      %v234 = vadd.f32 %v229, %v233
      %vm235 = vcmask 3072
      %236 = vst.msk [vmem:[#allocation2] sm:$0xf] %vm235, %v234
      %v237 = vld [vmem:[#allocation3] sm:$0xf]
      %v238 = vmul.f32 %v228, %v228
      %v239 = vsel %vm230, %v238, 0.0
      %240 = vadd.xlane.f32.xlu0 %v239
      %v241 = vpop.xlane.xlu0 %240
      %v242 = vadd.f32 %v237, %v241
      %243 = vst.msk [vmem:[#allocation3] sm:$0xf] %vm235, %v242
      %v244 = vld [vmem:[#allocation4] sm:$0xf]
      %245 = vmatprep.subr.mxu0 0.0
      %246 = vmatpush1.xpose.msra.mxu0 0.0
      %247 = vmatprep.subr.mxu0 0.0
      %248 = vmatpush1.xpose.msra.mxu0 0.0
      %249 = vmatprep.subr.mxu0 0.0
      %250 = vmatpush1.xpose.msra.mxu0 0.0
      %251 = vmatprep.subr.mxu0 0.0
      %252 = vmatpush1.xpose.msra.mxu0 0.0
      %253 = vmatprep.subr.mxu0 0.0
      %254 = vmatpush1.xpose.msra.mxu0 0.0
      %255 = vmatprep.subr.mxu0 0.0
      %256 = vmatpush1.xpose.msra.mxu0 0.0
      %257 = vmatprep.subr.mxu0 0.0
      %258 = vmatpush1.xpose.msra.mxu0 0.0
      %259 = vmatprep.subr.mxu0 0.0
      %260 = vmatpush1.xpose.msra.mxu0 0.0
      %261 = vmatprep.subr.mxu0 0.0
      %262 = vmatpush1.xpose.msra.mxu0 0.0
      %263 = vmatprep.subr.mxu0 0.0
      %264 = vmatpush1.xpose.msra.mxu0 0.0
      %265 = vmatprep.subr.mxu0 0.0
      %266 = vmatpush1.xpose.msra.mxu0 0.0
      %267 = vmatprep.subr.mxu0 0.0
      %268 = vmatpush1.xpose.msra.mxu0 0.0
      %269 = vmatprep.subr.mxu0 0.0
      %270 = vmatpush1.xpose.msra.mxu0 0.0
      %271 = vmatprep.subr.mxu0 0.0
      %272 = vmatpush1.xpose.msra.mxu0 0.0
      %273 = vmatprep.subr.mxu0 0.0
      %274 = vmatpush1.xpose.msra.mxu0 0.0
      %275 = vmatprep.subr.mxu0 0.0
      %276 = vmatpush1.xpose.msra.mxu0 %v228
      %277 = vmatprep.subr.mxu0 0.0
      %278 = vmatpush2.xpose.msra.mxu0 0.0
      %279 = vmatprep.subr.mxu0 0.0
      %280 = vmatpush2.xpose.msra.mxu0 0.0
      %281 = vmatprep.subr.mxu0 0.0
      %282 = vmatpush2.xpose.msra.mxu0 0.0
      %283 = vmatprep.subr.mxu0 0.0
      %284 = vmatpush2.xpose.msra.mxu0 0.0
      %285 = vmatprep.subr.mxu0 0.0
      %286 = vmatpush2.xpose.msra.mxu0 0.0
      %287 = vmatprep.subr.mxu0 0.0
      %288 = vmatpush2.xpose.msra.mxu0 0.0
      %289 = vmatprep.subr.mxu0 0.0
      %290 = vmatpush2.xpose.msra.mxu0 0.0
      %291 = vmatprep.subr.mxu0 0.0
      %292 = vmatpush2.xpose.msra.mxu0 0.0
      %293 = vmatprep.subr.mxu0 0.0
      %294 = vmatpush2.xpose.msra.mxu0 0.0
      %295 = vmatprep.subr.mxu0 0.0
      %296 = vmatpush2.xpose.msra.mxu0 0.0
      %297 = vmatprep.subr.mxu0 0.0
      %298 = vmatpush2.xpose.msra.mxu0 0.0
      %299 = vmatprep.subr.mxu0 0.0
      %300 = vmatpush2.xpose.msra.mxu0 0.0
      %301 = vmatprep.subr.mxu0 0.0
      %302 = vmatpush2.xpose.msra.mxu0 0.0
      %303 = vmatprep.subr.mxu0 0.0
      %304 = vmatpush2.xpose.msra.mxu0 0.0
      %305 = vmatprep.subr.mxu0 0.0
      %306 = vmatpush2.xpose.msra.mxu0 0.0
      %307 = vmatprep.subr.mxu0 0.0
      %308 = vmatpush2.xpose.msra.mxu0 0.0
      %309 = vmatprep.mubr.f32.mxu0 0.0
      %310 = vmatmul.mubr.f32.gmra.mxu0 %v228
      %v311 = vpop.f32.mrf.mxu0
      %v312 = vadd.f32 0.0, %v311
      %v313 = vpop.f32.mrf.mxu0
      %314 = vdwg.mxu0
      %v315 = vadd.f32 %v244, %v312
      %vm316 = vcmask 27648
      %317 = vst.msk [vmem:[#allocation4] sm:$0xf] %vm316, %v315
      %p318 = scmp.eq.s32.totalorder %s20, 1
      // Predicated region
      $region41: #{srm_with_corr_matrix.2} parent=35 // pred_check
        %p319 = pneg %p318
      $region42: #{srm_with_corr_matrix.2} parent=35 // pred_check_branch
        %321 = sbr.rel (%p319) target = $region44
      $region43: #{srm_with_corr_matrix.2} parent=35 // pred_region
        %v322 = vld [vmem:[#allocation2] sm:$0xf]
        %v323 = vmul.f32 %v322, 0.00390625
        %v324 = vld [vmem:[#allocation3] sm:$0xf]
        %v325 = vmul.f32 %v322, %v323
        %v326 = vsub.f32 %v324, %v325
        %v327 = vmax.f32 %v326, 0.0
        %v328 = vmul.f32 %v327, 0.003921569
        %v329 = vrsqrt.pop %v328
        %v330 = vmul.f32 %v328, %v329
        %vm331 = vcmp.eq.f32.partialorder %v328, inf
        %v332 = vsel %vm331, %v328, %v330
        %vm333 = vcmp.eq.f32.partialorder %v328, 0.0
        %v334 = vand.u32 %v328, 2147483648
        %v335 = vsel %vm333, %v334, %v332
        %v336 = vld [vmem:[#allocation4] sm:$0xf]
        %v337 = vmul.f32 %v336, 0.00048828125
        %v338 = vld [vmem:[%s1] sm:$0xf]
        %v339 = vmul.f32 %v323, %v338
        %v340 = vld [vmem:[%s2] sm:$0xf]
        %v341 = vmul.f32 %v335, %v340
        %v342 = vadd.f32 %v339, %v341
        %v343 = vld [vmem:[%s3] sm:$0xf]
        %v344 = vmul.f32 %v337, %v343
        %v345 = vsel %vm316, %v344, 0.0
        %346 = vadd.xlane.f32.xlu0 %v345
        %v347 = vpop.xlane.xlu0 %346
        %v348 = vadd.f32 %v342, %v347
        %349 = vst.msk [vmem:[%s218] sm:$0xf] %vm235, %v348
      $region44: #{srm_with_corr_matrix.2} parent=35 // pred_fallthru
        _
      %p350 = scmp.lt.s32.totalorder %s19, 1
      %s351 = scalar_select %p350, %s19, 1
      %s352 = smul.addr %s351, 4
      %s353 = scalar_lea.vmem %s4, %s352
      // Predicated region
      $region45: #{srm_with_corr_matrix.2} parent=35 // pred_check
        %p354 = pneg %p136
      $region46: #{srm_with_corr_matrix.2} parent=35 // pred_check_branch
        %356 = sbr.rel (%p354) target = $region48
      $region47: #{srm_with_corr_matrix.2} parent=35 // pred_region
        _
      $region48: #{srm_with_corr_matrix.2} parent=35 // pred_fallthru
        _
    $region36: #{srm_with_corr_matrix.2} parent=5 // pred_fallthru
      _
    %p357 = scmp.le.s32.totalorder 2, %s10
    // Predicated region
    $region49: #{srm_with_corr_matrix.2} parent=5 // pred_check
      %p358 = pneg %p357
    $region50: #{srm_with_corr_matrix.2} parent=5 // pred_check_branch
      %360 = sbr.rel (%p358) target = $region52
    $region51: #{srm_with_corr_matrix.2} parent=5 // pred_region
      %s361 = ssub.s32 %s10, 2
      // Predicated region
      $region53: #{srm_with_corr_matrix.2} parent=51 // pred_check
        %p362 = pneg %p142
      $region54: #{srm_with_corr_matrix.2} parent=51 // pred_check_branch
        %364 = sbr.rel (%p362) target = $region56
      $region55: #{srm_with_corr_matrix.2} parent=51 // pred_region
        %p365 = scmp.lt.s32.totalorder %s21, 1
        %s366 = scalar_select %p365, %s21, 1
        %s367 = smul.addr %s366, 4
        %s368 = scalar_lea.vmem %s4, %s367
      $region56: #{srm_with_corr_matrix.2} parent=51 // pred_fallthru
        _
    $region52: #{srm_with_corr_matrix.2} parent=5 // pred_fallthru
      _
  $region6: #{srm_with_corr_matrix.2} parent=0 // loop_footer
    %s14 = sadd.s32 1, %s10
  $region7: #{srm_with_corr_matrix.2} parent=0 // loop_footer_branch
    %9 = sbr.rel target = $region3
  $region8: #{srm_with_corr_matrix.2} parent=0 // loop_exit
    _

</llo_original>
